<compile_context>
chip_gen: v5e
topology: v5e:2x2
jax: 0.10.0
libtpu: 0.0.40
codegen_flags: <defaults>
</compile_context>

<pallas_src>
import functools

import numpy as np
import jax
import jax.numpy as jnp
from jax.experimental import pallas as pl
from jax.experimental.pallas import tpu as pltpu

RANKS = [10, 5, 5]


def _round_up(n, m):
    return ((n + m - 1) // m) * m


def _choose_tb(B):
    """Batch tile size: multiple of 8, >=2 tiles when B>8 (v7x megacore), cap 1024."""
    if B <= 8:
        return B                      # single full-extent block (legal: equals array dim)
    tb = _round_up(-(-B // 2), 8)     # split batch into ~2 balanced tiles
    return min(1024, tb)


# ---------------------------------------------------------------------------
# Kernel: one MXU matmul per batch tile against the resident fused weight.
# ---------------------------------------------------------------------------
def tucker_kernel(x_ref, w_ref, o_ref):
    o_ref[...] = jnp.dot(
        x_ref[...], w_ref[...], preferred_element_type=jnp.float32
    ).astype(o_ref.dtype)


# ---------------------------------------------------------------------------
# One-time parameter setup (hoisted out of the per-forward hot path).
# ---------------------------------------------------------------------------
def precompute_fused_weight(U1, U2, U3, core, input_shape, hidden_dim,
                            compute_dtype=jnp.bfloat16):
    """Fold kron(U2, U1) @ core.T @ U3.T into one (K, hidden_dim) matrix."""
    I0, I1 = input_shape
    r1 = U2.shape[1]
    r2 = U1.shape[1]
    # torch.kron(U2, U1): [i1*I0 + i0, j1*r2 + j2] = U2[i1, j1] * U1[i0, j2]
    kron = (U2[:, None, :, None] * U1[None, :, None, :]).reshape(I1 * I0, r1 * r2)
    W = kron @ core.T @ U3.T                       # (I0*I1, hidden_dim), f32
    assert W.shape == (I0 * I1, hidden_dim)
    return W.astype(compute_dtype)


# ---------------------------------------------------------------------------
# Forward: batch-tiled single-matmul Pallas call. No padding, no post-slice.
# ---------------------------------------------------------------------------
@functools.partial(jax.jit, static_argnames=("input_shape", "hidden_dim"))
def tucker_forward(x, W_fused, input_shape, hidden_dim):
    I0, I1 = input_shape
    B = x.shape[0]
    K = I0 * I1
    Kw, H = W_fused.shape
    assert Kw == K and H == hidden_dim
    compute_dtype = W_fused.dtype

    # Pure reshape (no data movement). Feed x already in compute_dtype so the
    # cast fuses with the upstream producer; if not, cast here (one extra pass).
    x_flat = x.reshape(B, K)
    if x_flat.dtype != compute_dtype:
        x_flat = x_flat.astype(compute_dtype)

    TB = _choose_tb(B)
    grid = (pl.cdiv(B, TB),)

    itemsize = jnp.dtype(compute_dtype).itemsize
    cost = pl.CostEstimate(
        flops=2 * B * K * H,
        transcendentals=0,
        bytes_accessed=B * K * itemsize + K * H * itemsize + B * H * 4,
    )

    out = pl.pallas_call(
        tucker_kernel,
        out_shape=jax.ShapeDtypeStruct((B, H), jnp.float32),
        grid=grid,
        in_specs=[
            pl.BlockSpec((TB, K), lambda i: (i, 0)),   # batch tile, pipelined
            pl.BlockSpec((K, H), lambda i: (0, 0)),    # fused weight, VMEM-resident
        ],
        out_specs=pl.BlockSpec((TB, H), lambda i: (i, 0)),
        compiler_params=pltpu.CompilerParams(
            dimension_semantics=("parallel",)),        # megacore on v7x
        cost_estimate=cost,
    )(x_flat, W_fused)

    return out


# ---------------------------------------------------------------------------
# Plain-JAX reference mirroring the PyTorch module line by line.
# ---------------------------------------------------------------------------
def tucker_reference(x, U1, U2, U3, core, input_shape):
    I0, I1 = input_shape
    B = x.shape[0]
    x = x.reshape(B, I0, I1)
    kron = (U2[:, None, :, None] * U1[None, :, None, :]).reshape(
        U2.shape[0] * U1.shape[0], U2.shape[1] * U1.shape[1])
    x = x.reshape(B, -1)
    temp = x @ kron
    temp = temp @ core.T
    return temp @ U3.T


if __name__ == "__main__":
    input_shape = (16, 16)       # (I0, I1)
    hidden_dim = 32
    I0, I1 = input_shape
    r0, r1, r2 = RANKS

    key = jax.random.PRNGKey(0)
    k_u3, k_core, k_u2, k_u1, k_x1, k_x2 = jax.random.split(key, 6)

    # Deterministic parameter init matching the PyTorch __init__ scaling.
    U3 = jax.random.normal(k_u3, (hidden_dim, r0), jnp.float32) / np.sqrt(hidden_dim)
    core = jax.random.normal(k_core, (r0, r1 * r2), jnp.float32) / np.sqrt(r0 * r1 * r2)
    U2 = jax.random.normal(k_u2, (I1, r1), jnp.float32) / np.sqrt(I1)
    U1 = jax.random.normal(k_u1, (I0, r2), jnp.float32) / np.sqrt(I0)

    # Weight fusion happens once, outside the forward path.
    W_f32 = precompute_fused_weight(U1, U2, U3, core, input_shape, hidden_dim,
                                    compute_dtype=jnp.float32)
    W_bf16 = precompute_fused_weight(U1, U2, U3, core, input_shape, hidden_dim,
                                     compute_dtype=jnp.bfloat16)

    # --- Small module-consistent batch, f32 path, strict tolerance. ---------
    x_small = jax.random.normal(k_x1, (2, I0, I1), jnp.float32)
    out_small = jax.block_until_ready(
        tucker_forward(x_small, W_f32, input_shape, hidden_dim))
    ref_small = tucker_reference(x_small, U1, U2, U3, core, input_shape)
    np.testing.assert_allclose(np.asarray(out_small), np.asarray(ref_small),
                               rtol=1e-4, atol=1e-5)

    # --- Larger batch: exercises the 2-tile grid with a ragged (OOB-masked)
    #     last block, no padding / no post-kernel slice. f32 strict check. ---
    x_big = jax.random.normal(k_x2, (1000, I0, I1), jnp.float32)
    out_big = jax.block_until_ready(
        tucker_forward(x_big, W_f32, input_shape, hidden_dim))
    ref_big = tucker_reference(x_big, U1, U2, U3, core, input_shape)
    np.testing.assert_allclose(np.asarray(out_big), np.asarray(ref_big),
                               rtol=1e-4, atol=1e-5)

    # --- bf16 compute path (halved HBM traffic for x and W), loose check. ---
    x_big_bf16 = x_big.astype(jnp.bfloat16)   # cast fused upstream in real use
    out_bf16 = jax.block_until_ready(
        tucker_forward(x_big_bf16, W_bf16, input_shape, hidden_dim))
    np.testing.assert_allclose(np.asarray(out_bf16), np.asarray(ref_big),
                               rtol=5e-2, atol=5e-3)

    print("KERNEL_OK")
</pallas_src>

<mosaic_0001>
module attributes {stable_mosaic.version = 11 : i64} {
  func.func @tucker_kernel(%arg0: i32, %arg1: memref<2x256xf32, #tpu.memory_space<vmem>>, %arg2: memref<256x32xf32, #tpu.memory_space<vmem>>, %arg3: memref<2x32xf32, #tpu.memory_space<vmem>>) attributes {dimension_semantics = [#tpu.dimension_semantics<parallel>], iteration_bounds = array<i64: 1>, scalar_prefetch = 0 : i64, scratch_operands = 0 : i64, tpu.core_type = #tpu.core_type<tc>, window_params = [{transform_indices = @transform_0, window_bounds = array<i64: 2, 256>}, {pipeline_mode = #tpu.pipeline_mode<synchronous>, transform_indices = @transform_1, window_bounds = array<i64: 256, 32>}, {transform_indices = @transform_2, window_bounds = array<i64: 2, 32>}]} {
    %c0 = arith.constant 0 : index
    %c0_0 = arith.constant 0 : index
    %0 = vector.load %arg1[%c0, %c0_0] : memref<2x256xf32, #tpu.memory_space<vmem>>, vector<2x256xf32>
    %c0_1 = arith.constant 0 : index
    %c0_2 = arith.constant 0 : index
    %1 = vector.load %arg2[%c0_1, %c0_2] : memref<256x32xf32, #tpu.memory_space<vmem>>, vector<256x32xf32>
    %cst = arith.constant dense<0.000000e+00> : vector<2x32xf32>
    %2 = tpu.matmul %0, %1, %cst {dimension_numbers = #tpu.dot_dimension_numbers<[1], [0], [0], [1], [0, 0, 1, 1], [], []>} : vector<2x256xf32>, vector<256x32xf32>, vector<2x32xf32> -> vector<2x32xf32>
    %c0_3 = arith.constant 0 : index
    %c0_4 = arith.constant 0 : index
    %3 = vector.load %arg3[%c0_3, %c0_4] : memref<2x32xf32, #tpu.memory_space<vmem>>, vector<2x32xf32>
    tpu.vector_store %arg3[%c0_3, %c0_4], %2 {strides = array<i32>} : memref<2x32xf32, #tpu.memory_space<vmem>>, vector<2x32xf32>,
    return
  }
  func.func @transform_0(%arg0: i32) -> (i32, i32) {
    %c0_i32 = arith.constant 0 : i32
    %c0_i32_0 = arith.constant 0 : i32
    return %arg0, %c0_i32 : i32, i32
  }
  func.func @transform_1(%arg0: i32) -> (i32, i32) {
    %c0_i32 = arith.constant 0 : i32
    %c0_i32_0 = arith.constant 0 : i32
    %c0_i32_1 = arith.constant 0 : i32
    return %c0_i32, %c0_i32_0 : i32, i32
  }
  func.func @transform_2(%arg0: i32) -> (i32, i32) {
    %c0_i32 = arith.constant 0 : i32
    %c0_i32_0 = arith.constant 0 : i32
    return %arg0, %c0_i32 : i32, i32
  }
}

</mosaic_0001>

<llo_original>
// kernel: tucker_forward.1
$region0: #{tucker_forward.1}
  #allocation0 [shape = 'u32[]', space=smem, size = 0x4, offset = 0x4, fixed_abs, tag = 'smem constant byte address 0x4 - core index']
  #allocation1 [shape = 'u32[72,128]{1,0:T(1,128)}', space=vmem, size = 0x9000, scoped, tag = 'internal scratch']
  %s0 = inlined_call_operand.vmem [shape: f32[2,256], index: 0, kind: input, shape index: {}]
  %s1 = inlined_call_operand.vmem [shape: f32[256,32], index: 1, kind: input, shape index: {}]
  %s2 = inlined_call_operand.hbm [shape: f32[2,32], index: 2, kind: output, shape index: {}]
  %s3 = sld [smem:[#allocation0]]
  $region18: #{tucker_forward.1} parent=0
    _
  %s5 = ssub.s32 1, %s3
  %s6 = scalar_select 0, %s5, %s3
  $region1: #{tucker_forward.1} parent=0
    #allocation2 [shape = 'u8[1024]{0}', space=vmem, size = 0x400, scoped, tag = 'output window, operand 0, single buffered']
    #allocation3 [shape = 's32[1]{0}', space=sflag, size = 0x4, scoped, tag = 'scoped memory for tucker_forward.1']
    %7 = vsyncpa [#allocation3], 0
    // Predicated region
    $region2: #{tucker_forward.1} parent=1 // pred_check
      _
    $region3: #{tucker_forward.1} parent=1 // pred_check_branch
      %9 = sbr.rel (0) target = $region5
    $region4: #{tucker_forward.1} parent=1 // pred_region
      _
    $region5: #{tucker_forward.1} parent=1 // pred_fallthru
      _
    // Predicated region
    $region6: #{tucker_forward.1} parent=1 // pred_check
      _
    $region7: #{tucker_forward.1} parent=1 // pred_check_branch
      %11 = sbr.rel (0) target = $region9
    $region8: #{tucker_forward.1} parent=1 // pred_region
      _
    $region9: #{tucker_forward.1} parent=1 // pred_fallthru
      _
    %v12 = vld [vmem:[%s0] sm:$0xf]
    %v13 = vld [vmem:[%s1] sm:$0xff]
    %v14 = vld [vmem:[%s1 + $0x8] sm:$0xff]
    %v15 = vld [vmem:[%s1 + $0x10] sm:$0xff]
    %v16 = vld [vmem:[%s1 + $0x18] sm:$0xff]
    %v17 = vld [vmem:[%s1 + $0x20] sm:$0xff]
    %v18 = vld [vmem:[%s1 + $0x28] sm:$0xff]
    %v19 = vld [vmem:[%s1 + $0x30] sm:$0xff]
    %v20 = vld [vmem:[%s1 + $0x38] sm:$0xff]
    %v21 = vld [vmem:[%s1 + $0x40] sm:$0xff]
    %v22 = vld [vmem:[%s1 + $0x48] sm:$0xff]
    %v23 = vld [vmem:[%s1 + $0x50] sm:$0xff]
    %v24 = vld [vmem:[%s1 + $0x58] sm:$0xff]
    %v25 = vld [vmem:[%s1 + $0x60] sm:$0xff]
    %v26 = vld [vmem:[%s1 + $0x68] sm:$0xff]
    %v27 = vld [vmem:[%s1 + $0x70] sm:$0xff]
    %v28 = vld [vmem:[%s1 + $0x78] sm:$0xff]
    %v29 = vld [vmem:[%s1 + $0x80] sm:$0xff]
    %v30 = vld [vmem:[%s1 + $0x88] sm:$0xff]
    %v31 = vld [vmem:[%s1 + $0x90] sm:$0xff]
    %v32 = vld [vmem:[%s1 + $0x98] sm:$0xff]
    %v33 = vld [vmem:[%s1 + $0xa0] sm:$0xff]
    %v34 = vld [vmem:[%s1 + $0xa8] sm:$0xff]
    %v35 = vld [vmem:[%s1 + $0xb0] sm:$0xff]
    %v36 = vld [vmem:[%s1 + $0xb8] sm:$0xff]
    %v37 = vld [vmem:[%s1 + $0xc0] sm:$0xff]
    %v38 = vld [vmem:[%s1 + $0xc8] sm:$0xff]
    %v39 = vld [vmem:[%s1 + $0xd0] sm:$0xff]
    %v40 = vld [vmem:[%s1 + $0xd8] sm:$0xff]
    %v41 = vld [vmem:[%s1 + $0xe0] sm:$0xff]
    %v42 = vld [vmem:[%s1 + $0xe8] sm:$0xff]
    %v43 = vld [vmem:[%s1 + $0xf0] sm:$0xff]
    %v44 = vld [vmem:[%s1 + $0xf8] sm:$0xff]
    %46 = vst [vmem:[#allocation1] ss:$4 sm:$0xff] %v12
    %v47 = vld.sshfl [vmem:[#allocation1] sm:$0xff pattern:$0x73625140]
    %v48 = vld.sshfl [vmem:[#allocation1 + $0x8] sm:$0xff pattern:$0x73625140]
    %51 = vmatpush.msra.mxu0 %v28
    %52 = vmatpush.msra.mxu0 %v27
    %53 = vmatpush.msra.mxu0 %v26
    %54 = vmatpush.msra.mxu0 %v25
    %55 = vmatpush.msra.mxu0 %v24
    %56 = vmatpush.msra.mxu0 %v23
    %57 = vmatpush.msra.mxu0 %v22
    %58 = vmatpush.msra.mxu0 %v21
    %59 = vmatpush.msra.mxu0 %v20
    %60 = vmatpush.msra.mxu0 %v19
    %61 = vmatpush.msra.mxu0 %v18
    %62 = vmatpush.msra.mxu0 %v17
    %63 = vmatpush.msra.mxu0 %v16
    %64 = vmatpush.msra.mxu0 %v15
    %65 = vmatpush.msra.mxu0 %v14
    %66 = vmatpush.msra.mxu0 %v13
    %67 = vmatmul.f32.gmra.mxu0 %v47
    %v68 = vpop.f32.mrf.mxu0
    %v69 = vadd.f32 0.0, %v68
    %70 = vdwg.mxu0
    %71 = vmatpush.msra.mxu0 %v44
    %72 = vmatpush.msra.mxu0 %v43
    %73 = vmatpush.msra.mxu0 %v42
    %74 = vmatpush.msra.mxu0 %v41
    %75 = vmatpush.msra.mxu0 %v40
    %76 = vmatpush.msra.mxu0 %v39
    %77 = vmatpush.msra.mxu0 %v38
    %78 = vmatpush.msra.mxu0 %v37
    %79 = vmatpush.msra.mxu0 %v36
    %80 = vmatpush.msra.mxu0 %v35
    %81 = vmatpush.msra.mxu0 %v34
    %82 = vmatpush.msra.mxu0 %v33
    %83 = vmatpush.msra.mxu0 %v32
    %84 = vmatpush.msra.mxu0 %v31
    %85 = vmatpush.msra.mxu0 %v30
    %86 = vmatpush.msra.mxu0 %v29
    %87 = vmatmul.f32.gmra.mxu0 %v48
    %v88 = vpop.f32.mrf.mxu0
    %v89 = vadd.f32 %v69, %v88
    %90 = vdwg.mxu0
    %vm91 = vcmask 254976
    %92 = vst.msk [vmem:[#allocation2] sm:$0x3] %vm91, %v89
    // Predicated region
    $region10: #{tucker_forward.1} parent=1 // pred_check
      _
    $region11: #{tucker_forward.1} parent=1 // pred_check_branch
      %94 = sbr.rel (0) target = $region13
    $region12: #{tucker_forward.1} parent=1 // pred_region
      %96 = vsyncadd [#allocation3], 0
      %s98 = sshll.u32 [#allocation2], 4
      %s99 = int_to_ptr.vmem [resolvable:$true] %s98
      %s100 = sshll.u32 %s2, 4
      %s101 = int_to_ptr.hbm [resolvable:$true] %s100
      %103 = dma.vmem_to_hbm [thread:$0]  %s99, 32, %s101, [#allocation3]
    $region13: #{tucker_forward.1} parent=1 // pred_fallthru
      _
    // Predicated region
    $region14: #{tucker_forward.1} parent=1 // pred_check
      _
    $region15: #{tucker_forward.1} parent=1 // pred_check_branch
      %105 = sbr.rel (0) target = $region17
    $region16: #{tucker_forward.1} parent=1 // pred_region
      %107 = dma.done [#allocation3], 32
    $region17: #{tucker_forward.1} parent=1 // pred_fallthru
      _
    %108 = vsyncpa [#allocation3], 1

</llo_original>
